<compile_context>
chip_gen: v5e
topology: v5e:2x2
jax: 0.10.0
libtpu: 0.0.40
codegen_flags: <defaults>
</compile_context>

<pallas_src>
import functools

import numpy as np
import jax
import jax.numpy as jnp
from jax.experimental import pallas as pl
from jax.experimental.pallas import tpu as pltpu

KERNEL_SIZE = 11
SIGMA = 1.5
K1 = 0.01
K2 = 0.03


def _gaussian_1d(kernel_size=KERNEL_SIZE, sigma=SIGMA):
    # identical to torchmetrics' _gaussian
    dist = np.arange((1 - kernel_size) / 2.0, (1 + kernel_size) / 2.0, 1.0,
                     dtype=np.float64)
    g = np.exp(-((dist / sigma) ** 2) / 2.0)
    return (g / g.sum()).astype(np.float32)


def _row_blur_matrix(h):
    """Valid-window 1D Gaussian blur over H expressed as a (H_out, H) matmul."""
    g = _gaussian_1d()
    h_out = h - KERNEL_SIZE + 1
    a_h = np.zeros((h_out, h), dtype=np.float32)
    for i in range(h_out):
        a_h[i, i:i + KERNEL_SIZE] = g
    return jnp.asarray(a_h)


def _sel_matrix(bt, c, w, h_out, w_out):
    """(valid_lanes, Bt) 0/normalization matrix: lane -> per-sample mean.

    Lane m of a block maps to (b, ch, col) = (m // (c*w), (m // w) % c, m % w);
    only col < w_out positions are real SSIM-map entries (the rest are the
    finite junk produced by the shift-and-add crossing image boundaries)."""
    seg = bt * c * w
    valid = seg - (KERNEL_SIZE - 1)
    sel = np.zeros((valid, bt), dtype=np.float32)
    norm = 1.0 / float(c * h_out * w_out)
    for m in range(valid):
        if (m % w) < w_out:
            sel[m, m // (c * w)] = norm
    return jnp.asarray(sel)


def _choose_block_batch(b, c, w, h, budget_bytes=2 << 20):
    """Samples per grid step: keep lanes 128-aligned and the tile small."""
    lane_unit = c * w
    divisors = [d for d in range(1, b + 1) if b % d == 0]
    aligned = [d for d in divisors if (d * lane_unit) % 128 == 0]
    if not aligned:
        return b  # full-batch block (BlockSpec allows full-extent dims)
    fitting = [d for d in aligned if h * d * lane_unit * 4 <= budget_bytes]
    return max(fitting) if fitting else min(aligned)


def _ssim_loss_kernel(pred_ref, target_ref, a_h_ref, sel_ref, out_ref, *,
                      c1, c2, weight, clip_min, clip_max, taps, seg, valid):
    # pred_ref/target_ref: (H, seg) with lanes ordered (sample, channel, col)
    p = jnp.clip(pred_ref[...].astype(jnp.float32), clip_min, clip_max)
    t = jnp.clip(target_ref[...].astype(jnp.float32), clip_min, clip_max)

    # One stacked, lane-dense MXU matmul for the H-direction blur of all 5
    # operands, all channels and Bt samples at once: (H_out, H) @ (H, 5*seg).
    rhs = jnp.concatenate([p, t, p * p, t * t, p * t], axis=1)          # (H, 5*seg)
    y = jnp.dot(a_h_ref[...], rhs, preferred_element_type=jnp.float32)  # (H_out, 5*seg)

    # Banded 11-tap W-direction blur: shift-and-add with static lane slices
    # (VPU FMA); lanes whose window crosses an image boundary become finite
    # junk and are excluded by the selection matrix below.
    n_taps = len(taps)
    zw = 5 * seg - (n_taps - 1)
    z = taps[0] * y[:, 0:zw]
    for k in range(1, n_taps):
        z = z + taps[k] * y[:, k:k + zw]

    # Extract the five blurred maps (operand index is the outermost lane factor).
    mu_p = z[:, 0 * seg: 0 * seg + valid]
    mu_t = z[:, 1 * seg: 1 * seg + valid]
    e_pp = z[:, 2 * seg: 2 * seg + valid]
    e_tt = z[:, 3 * seg: 3 * seg + valid]
    e_pt = z[:, 4 * seg: 4 * seg + valid]

    sig_p = e_pp - mu_p * mu_p
    sig_t = e_tt - mu_t * mu_t
    sig_pt = e_pt - mu_p * mu_t

    num = (2.0 * mu_p * mu_t + c1) * (2.0 * sig_pt + c2)
    den = (mu_p * mu_p + mu_t * mu_t + c1) * (sig_p + sig_t + c2)
    ssim_map = num * pl.reciprocal(den, approx=False)                    # (H_out, valid)

    # One sublane reduction + one tiny matmul -> per-sample mean SSIM (1, Bt).
    row_sum = jnp.sum(ssim_map, axis=0, keepdims=True)                   # (1, valid)
    mean_ssim = jnp.dot(row_sum, sel_ref[...],
                        preferred_element_type=jnp.float32)              # (1, Bt)

    loss = (jnp.float32(1.0) - mean_ssim) * jnp.float32(weight)
    out_ref[...] = loss.reshape(out_ref.shape)                           # (1, 1, Bt)


def ssim_loss(pred, target, data_range, weight=1.0):
    """Returns per-sample loss (1 - ssim) * weight, shape (B,). NCHW inputs."""
    b, c, h, w = pred.shape
    assert target.shape == pred.shape
    assert h >= KERNEL_SIZE and w >= KERNEL_SIZE, "image smaller than SSIM window"
    h_out = h - KERNEL_SIZE + 1
    w_out = w - KERNEL_SIZE + 1

    dr = float(data_range[1]) - float(data_range[0])
    c1 = (K1 * dr) ** 2
    c2 = (K2 * dr) ** 2

    bt = _choose_block_batch(b, c, w, h)
    n_steps = b // bt
    seg = bt * c * w
    valid = seg - (KERNEL_SIZE - 1)

    a_h = _row_blur_matrix(h)
    sel = _sel_matrix(bt, c, w, h_out, w_out)
    taps = tuple(float(x) for x in _gaussian_1d())

    # Layout plumbing in the wrapper (free XLA work): NCHW -> (H, B*C*W) so the
    # kernel sees lane-dense 2D tiles with H on sublanes.
    pred2 = jnp.transpose(pred, (2, 0, 1, 3)).reshape(h, b * c * w)
    targ2 = jnp.transpose(target, (2, 0, 1, 3)).reshape(h, b * c * w)

    kernel = functools.partial(
        _ssim_loss_kernel, c1=c1, c2=c2, weight=float(weight),
        clip_min=float(data_range[0]), clip_max=float(data_range[1]),
        taps=taps, seg=seg, valid=valid)

    out = pl.pallas_call(
        kernel,
        out_shape=jax.ShapeDtypeStruct((n_steps, 1, bt), jnp.float32),
        grid_spec=pltpu.PrefetchScalarGridSpec(
            num_scalar_prefetch=0,
            grid=(n_steps,),
            in_specs=[
                pl.BlockSpec((h, seg), lambda i: (0, i)),
                pl.BlockSpec((h, seg), lambda i: (0, i)),
                pl.BlockSpec((h_out, h), lambda i: (0, 0)),
                pl.BlockSpec((valid, bt), lambda i: (0, 0)),
            ],
            out_specs=pl.BlockSpec((1, 1, bt), lambda i: (i, 0, 0)),
        ),
        compiler_params=pltpu.CompilerParams(
            dimension_semantics=("parallel",),
            vmem_limit_bytes=64 * 1024 * 1024),
    )(pred2, targ2, a_h, sel)
    return out.reshape(b)


def loss_ssim_forward(batch, model_output, *, batch_key, data_range, weight=1.0):
    """Mirrors LossSSIM.forward: returns {'losses': {'ssim': (B,)}}."""
    # TODO(synk): torchmetrics' cross-batch running state (update/compute) has
    # no single-kernel equivalent; this implements the per-batch forward value.
    target = batch[batch_key]
    return {"metrics": {},
            "losses": {"ssim": ssim_loss(model_output, target, data_range, weight)}}


def _ssim_loss_ref(pred, target, data_range, weight=1.0):
    """Pure-numpy reference for verification."""
    pred = np.clip(np.asarray(pred, np.float64), data_range[0], data_range[1])
    target = np.clip(np.asarray(target, np.float64), data_range[0], data_range[1])
    g = _gaussian_1d().astype(np.float64)
    k2d = np.outer(g, g)
    dr = data_range[1] - data_range[0]
    c1 = (K1 * dr) ** 2
    c2 = (K2 * dr) ** 2
    b, c, h, w = pred.shape
    hout, wout = h - KERNEL_SIZE + 1, w - KERNEL_SIZE + 1

    def blur(x):
        out = np.zeros((hout, wout))
        for i in range(hout):
            for j in range(wout):
                out[i, j] = np.sum(x[i:i + KERNEL_SIZE, j:j + KERNEL_SIZE] * k2d)
        return out

    losses = []
    for bi in range(b):
        acc = 0.0
        for ci in range(c):
            p, t = pred[bi, ci], target[bi, ci]
            mu_p, mu_t = blur(p), blur(t)
            sp = blur(p * p) - mu_p ** 2
            st = blur(t * t) - mu_t ** 2
            spt = blur(p * t) - mu_p * mu_t
            ssim = ((2 * mu_p * mu_t + c1) * (2 * spt + c2)) / \
                   ((mu_p ** 2 + mu_t ** 2 + c1) * (sp + st + c2))
            acc += ssim.sum()
        losses.append((1.0 - acc / (c * hout * wout)) * weight)
    return np.array(losses)


if __name__ == "__main__":
    key = jax.random.PRNGKey(0)
    k1, k2 = jax.random.split(key)
    B, C, H, W = 2, 4, 16, 16
    data_range = (0.0, 1.0)

    model_output = jax.random.uniform(k1, (B, C, H, W), dtype=jnp.float32)
    target = jnp.clip(
        model_output + 0.1 * jax.random.normal(k2, (B, C, H, W), dtype=jnp.float32),
        0.0, 1.0)
    batch = {"image": target}

    out = loss_ssim_forward(batch, model_output,
                            batch_key="image", data_range=data_range, weight=1.0)
    loss = jax.block_until_ready(out["losses"]["ssim"])

    ref = _ssim_loss_ref(model_output, target, data_range, weight=1.0)
    np.testing.assert_allclose(np.asarray(loss), ref, rtol=2e-4, atol=1e-5)
    print("KERNEL_OK")
</pallas_src>

<mosaic_0001>
module attributes {stable_mosaic.version = 11 : i64} {
  func.func @_ssim_loss_kernel(%arg0: i32, %arg1: memref<16x128xf32, #tpu.memory_space<vmem>>, %arg2: memref<16x128xf32, #tpu.memory_space<vmem>>, %arg3: memref<6x16xf32, #tpu.memory_space<vmem>>, %arg4: memref<118x2xf32, #tpu.memory_space<vmem>>, %arg5: memref<1x1x2xf32, #tpu.memory_space<vmem>>) attributes {dimension_semantics = [#tpu.dimension_semantics<parallel>], iteration_bounds = array<i64: 1>, scalar_prefetch = 0 : i64, scratch_operands = 0 : i64, tpu.core_type = #tpu.core_type<tc>, window_params = [{transform_indices = @transform_0, window_bounds = array<i64: 16, 128>}, {transform_indices = @transform_1, window_bounds = array<i64: 16, 128>}, {pipeline_mode = #tpu.pipeline_mode<synchronous>, transform_indices = @transform_2, window_bounds = array<i64: 6, 16>}, {pipeline_mode = #tpu.pipeline_mode<synchronous>, transform_indices = @transform_3, window_bounds = array<i64: 118, 2>}, {transform_indices = @transform_4, window_bounds = array<i64: 1, 1, 2>}]} {
    %c0 = arith.constant 0 : index
    %c0_0 = arith.constant 0 : index
    %0 = vector.load %arg1[%c0, %c0_0] : memref<16x128xf32, #tpu.memory_space<vmem>>, vector<16x128xf32>
    %cst = arith.constant 0.000000e+00 : f32
    %cst_1 = arith.constant 1.000000e+00 : f32
    %1 = vector.broadcast %cst : f32 to vector<16x128xf32>
    %2 = arith.maximumf %1, %0 : vector<16x128xf32>
    %3 = vector.broadcast %cst_1 : f32 to vector<16x128xf32>
    %4 = arith.minimumf %3, %2 : vector<16x128xf32>
    %c0_2 = arith.constant 0 : index
    %c0_3 = arith.constant 0 : index
    %5 = vector.load %arg2[%c0_2, %c0_3] : memref<16x128xf32, #tpu.memory_space<vmem>>, vector<16x128xf32>
    %cst_4 = arith.constant 0.000000e+00 : f32
    %cst_5 = arith.constant 1.000000e+00 : f32
    %6 = vector.broadcast %cst_4 : f32 to vector<16x128xf32>
    %7 = arith.maximumf %6, %5 : vector<16x128xf32>
    %8 = vector.broadcast %cst_5 : f32 to vector<16x128xf32>
    %9 = arith.minimumf %8, %7 : vector<16x128xf32>
    %10 = arith.mulf %4, %4 : vector<16x128xf32>
    %11 = arith.mulf %9, %9 : vector<16x128xf32>
    %12 = arith.mulf %4, %9 : vector<16x128xf32>
    %13 = tpu.concatenate %4, %9, %10, %11, %12 in 1 : vector<16x128xf32>, vector<16x128xf32>, vector<16x128xf32>, vector<16x128xf32>, vector<16x128xf32> -> vector<16x640xf32>
    %c0_6 = arith.constant 0 : index
    %c0_7 = arith.constant 0 : index
    %14 = vector.load %arg3[%c0_6, %c0_7] : memref<6x16xf32, #tpu.memory_space<vmem>>, vector<6x16xf32>
    %cst_8 = arith.constant dense<0.000000e+00> : vector<6x640xf32>
    %15 = tpu.matmul %14, %13, %cst_8 {dimension_numbers = #tpu.dot_dimension_numbers<[1], [0], [0], [1], [0, 0, 1, 1], [], []>} : vector<6x16xf32>, vector<16x640xf32>, vector<6x640xf32> -> vector<6x640xf32>
    %16 = vector.extract_strided_slice %15 {offsets = [0, 0], sizes = [6, 630], strides = [1, 1]} : vector<6x640xf32> to vector<6x630xf32>
    %cst_9 = arith.constant 0.00102838012 : f32
    %17 = vector.broadcast %cst_9 : f32 to vector<6x630xf32>
    %18 = arith.mulf %17, %16 : vector<6x630xf32>
    %19 = vector.extract_strided_slice %15 {offsets = [0, 1], sizes = [6, 630], strides = [1, 1]} : vector<6x640xf32> to vector<6x630xf32>
    %cst_10 = arith.constant 0.00759875821 : f32
    %20 = vector.broadcast %cst_10 : f32 to vector<6x630xf32>
    %21 = arith.mulf %20, %19 : vector<6x630xf32>
    %22 = arith.addf %18, %21 : vector<6x630xf32>
    %23 = vector.extract_strided_slice %15 {offsets = [0, 2], sizes = [6, 630], strides = [1, 1]} : vector<6x640xf32> to vector<6x630xf32>
    %cst_11 = arith.constant 0.0360007733 : f32
    %24 = vector.broadcast %cst_11 : f32 to vector<6x630xf32>
    %25 = arith.mulf %24, %23 : vector<6x630xf32>
    %26 = arith.addf %22, %25 : vector<6x630xf32>
    %27 = vector.extract_strided_slice %15 {offsets = [0, 3], sizes = [6, 630], strides = [1, 1]} : vector<6x640xf32> to vector<6x630xf32>
    %cst_12 = arith.constant 0.109360687 : f32
    %28 = vector.broadcast %cst_12 : f32 to vector<6x630xf32>
    %29 = arith.mulf %28, %27 : vector<6x630xf32>
    %30 = arith.addf %26, %29 : vector<6x630xf32>
    %31 = vector.extract_strided_slice %15 {offsets = [0, 4], sizes = [6, 630], strides = [1, 1]} : vector<6x640xf32> to vector<6x630xf32>
    %cst_13 = arith.constant 0.213005543 : f32
    %32 = vector.broadcast %cst_13 : f32 to vector<6x630xf32>
    %33 = arith.mulf %32, %31 : vector<6x630xf32>
    %34 = arith.addf %30, %33 : vector<6x630xf32>
    %35 = vector.extract_strided_slice %15 {offsets = [0, 5], sizes = [6, 630], strides = [1, 1]} : vector<6x640xf32> to vector<6x630xf32>
    %cst_14 = arith.constant 0.266011715 : f32
    %36 = vector.broadcast %cst_14 : f32 to vector<6x630xf32>
    %37 = arith.mulf %36, %35 : vector<6x630xf32>
    %38 = arith.addf %34, %37 : vector<6x630xf32>
    %39 = vector.extract_strided_slice %15 {offsets = [0, 6], sizes = [6, 630], strides = [1, 1]} : vector<6x640xf32> to vector<6x630xf32>
    %cst_15 = arith.constant 0.213005543 : f32
    %40 = vector.broadcast %cst_15 : f32 to vector<6x630xf32>
    %41 = arith.mulf %40, %39 : vector<6x630xf32>
    %42 = arith.addf %38, %41 : vector<6x630xf32>
    %43 = vector.extract_strided_slice %15 {offsets = [0, 7], sizes = [6, 630], strides = [1, 1]} : vector<6x640xf32> to vector<6x630xf32>
    %cst_16 = arith.constant 0.109360687 : f32
    %44 = vector.broadcast %cst_16 : f32 to vector<6x630xf32>
    %45 = arith.mulf %44, %43 : vector<6x630xf32>
    %46 = arith.addf %42, %45 : vector<6x630xf32>
    %47 = vector.extract_strided_slice %15 {offsets = [0, 8], sizes = [6, 630], strides = [1, 1]} : vector<6x640xf32> to vector<6x630xf32>
    %cst_17 = arith.constant 0.0360007733 : f32
    %48 = vector.broadcast %cst_17 : f32 to vector<6x630xf32>
    %49 = arith.mulf %48, %47 : vector<6x630xf32>
    %50 = arith.addf %46, %49 : vector<6x630xf32>
    %51 = vector.extract_strided_slice %15 {offsets = [0, 9], sizes = [6, 630], strides = [1, 1]} : vector<6x640xf32> to vector<6x630xf32>
    %cst_18 = arith.constant 0.00759875821 : f32
    %52 = vector.broadcast %cst_18 : f32 to vector<6x630xf32>
    %53 = arith.mulf %52, %51 : vector<6x630xf32>
    %54 = arith.addf %50, %53 : vector<6x630xf32>
    %55 = vector.extract_strided_slice %15 {offsets = [0, 10], sizes = [6, 630], strides = [1, 1]} : vector<6x640xf32> to vector<6x630xf32>
    %cst_19 = arith.constant 0.00102838012 : f32
    %56 = vector.broadcast %cst_19 : f32 to vector<6x630xf32>
    %57 = arith.mulf %56, %55 : vector<6x630xf32>
    %58 = arith.addf %54, %57 : vector<6x630xf32>
    %59 = vector.extract_strided_slice %58 {offsets = [0, 0], sizes = [6, 118], strides = [1, 1]} : vector<6x630xf32> to vector<6x118xf32>
    %60 = vector.extract_strided_slice %58 {offsets = [0, 128], sizes = [6, 118], strides = [1, 1]} : vector<6x630xf32> to vector<6x118xf32>
    %61 = vector.extract_strided_slice %58 {offsets = [0, 256], sizes = [6, 118], strides = [1, 1]} : vector<6x630xf32> to vector<6x118xf32>
    %62 = vector.extract_strided_slice %58 {offsets = [0, 384], sizes = [6, 118], strides = [1, 1]} : vector<6x630xf32> to vector<6x118xf32>
    %63 = vector.extract_strided_slice %58 {offsets = [0, 512], sizes = [6, 118], strides = [1, 1]} : vector<6x630xf32> to vector<6x118xf32>
    %64 = arith.mulf %59, %59 : vector<6x118xf32>
    %65 = arith.subf %61, %64 : vector<6x118xf32>
    %66 = arith.mulf %60, %60 : vector<6x118xf32>
    %67 = arith.subf %62, %66 : vector<6x118xf32>
    %68 = arith.mulf %59, %60 : vector<6x118xf32>
    %69 = arith.subf %63, %68 : vector<6x118xf32>
    %cst_20 = arith.constant 2.000000e+00 : f32
    %70 = vector.broadcast %cst_20 : f32 to vector<6x118xf32>
    %71 = arith.mulf %70, %59 : vector<6x118xf32>
    %72 = arith.mulf %71, %60 : vector<6x118xf32>
    %cst_21 = arith.constant 9.99999974E-5 : f32
    %73 = vector.broadcast %cst_21 : f32 to vector<6x118xf32>
    %74 = arith.addf %72, %73 : vector<6x118xf32>
    %cst_22 = arith.constant 2.000000e+00 : f32
    %75 = vector.broadcast %cst_22 : f32 to vector<6x118xf32>
    %76 = arith.mulf %75, %69 : vector<6x118xf32>
    %cst_23 = arith.constant 8.99999984E-4 : f32
    %77 = vector.broadcast %cst_23 : f32 to vector<6x118xf32>
    %78 = arith.addf %76, %77 : vector<6x118xf32>
    %79 = arith.mulf %74, %78 : vector<6x118xf32>
    %80 = arith.mulf %59, %59 : vector<6x118xf32>
    %81 = arith.mulf %60, %60 : vector<6x118xf32>
    %82 = arith.addf %80, %81 : vector<6x118xf32>
    %cst_24 = arith.constant 9.99999974E-5 : f32
    %83 = vector.broadcast %cst_24 : f32 to vector<6x118xf32>
    %84 = arith.addf %82, %83 : vector<6x118xf32>
    %85 = arith.addf %65, %67 : vector<6x118xf32>
    %cst_25 = arith.constant 8.99999984E-4 : f32
    %86 = vector.broadcast %cst_25 : f32 to vector<6x118xf32>
    %87 = arith.addf %85, %86 : vector<6x118xf32>
    %88 = arith.mulf %84, %87 : vector<6x118xf32>
    %89 = tpu.reciprocal %88 : vector<6x118xf32> -> vector<6x118xf32>
    %90 = arith.mulf %79, %89 : vector<6x118xf32>
    %cst_26 = arith.constant dense<0.000000e+00> : vector<118xf32>
    %91 = vector.multi_reduction <add>, %90, %cst_26 [0] : vector<6x118xf32> to vector<118xf32>
    %92 = vector.shape_cast %91 : vector<118xf32> to vector<1x118xf32>
    %c0_27 = arith.constant 0 : index
    %c0_28 = arith.constant 0 : index
    %93 = vector.load %arg4[%c0_27, %c0_28] : memref<118x2xf32, #tpu.memory_space<vmem>>, vector<118x2xf32>
    %cst_29 = arith.constant dense<0.000000e+00> : vector<1x2xf32>
    %94 = tpu.matmul %92, %93, %cst_29 {dimension_numbers = #tpu.dot_dimension_numbers<[1], [0], [0], [1], [0, 0, 1, 1], [], []>} : vector<1x118xf32>, vector<118x2xf32>, vector<1x2xf32> -> vector<1x2xf32>
    %cst_30 = arith.constant 1.000000e+00 : f32
    %95 = vector.broadcast %cst_30 : f32 to vector<1x2xf32>
    %96 = arith.subf %95, %94 : vector<1x2xf32>
    %cst_31 = arith.constant 1.000000e+00 : f32
    %97 = vector.broadcast %cst_31 : f32 to vector<1x2xf32>
    %98 = arith.mulf %96, %97 : vector<1x2xf32>
    %99 = vector.shape_cast %98 : vector<1x2xf32> to vector<1x1x2xf32>
    %c0_32 = arith.constant 0 : index
    %c0_33 = arith.constant 0 : index
    %c0_34 = arith.constant 0 : index
    %100 = vector.load %arg5[%c0_32, %c0_33, %c0_34] : memref<1x1x2xf32, #tpu.memory_space<vmem>>, vector<1x1x2xf32>
    tpu.vector_store %arg5[%c0_32, %c0_33, %c0_34], %99 {strides = array<i32>} : memref<1x1x2xf32, #tpu.memory_space<vmem>>, vector<1x1x2xf32>,
    return
  }
  func.func @transform_0(%arg0: i32) -> (i32, i32) {
    %c0_i32 = arith.constant 0 : i32
    %c0_i32_0 = arith.constant 0 : i32
    return %c0_i32, %arg0 : i32, i32
  }
  func.func @transform_1(%arg0: i32) -> (i32, i32) {
    %c0_i32 = arith.constant 0 : i32
    %c0_i32_0 = arith.constant 0 : i32
    return %c0_i32, %arg0 : i32, i32
  }
  func.func @transform_2(%arg0: i32) -> (i32, i32) {
    %c0_i32 = arith.constant 0 : i32
    %c0_i32_0 = arith.constant 0 : i32
    %c0_i32_1 = arith.constant 0 : i32
    return %c0_i32, %c0_i32_0 : i32, i32
  }
  func.func @transform_3(%arg0: i32) -> (i32, i32) {
    %c0_i32 = arith.constant 0 : i32
    %c0_i32_0 = arith.constant 0 : i32
    %c0_i32_1 = arith.constant 0 : i32
    return %c0_i32, %c0_i32_0 : i32, i32
  }
  func.func @transform_4(%arg0: i32) -> (i32, i32, i32) {
    %c0_i32 = arith.constant 0 : i32
    %c0_i32_0 = arith.constant 0 : i32
    %c0_i32_1 = arith.constant 0 : i32
    return %arg0, %c0_i32, %c0_i32_0 : i32, i32, i32
  }
}

</mosaic_0001>

<llo_original>
// kernel: tpu_custom_call.1
$region0: #{tpu_custom_call.1}
  #allocation0 [shape = 'u32[]', space=smem, size = 0x4, offset = 0x4, fixed_abs, tag = 'smem constant byte address 0x4 - core index']
  #allocation1 [shape = 'u32[72,128]{1,0:T(1,128)}', space=vmem, size = 0x9000, scoped, tag = 'internal scratch']
  %s0 = inlined_call_operand.vmem [shape: f32[16,128], index: 0, kind: input, shape index: {}]
  %s1 = inlined_call_operand.vmem [shape: f32[16,128], index: 1, kind: input, shape index: {}]
  %s2 = inlined_call_operand.vmem [shape: f32[6,16], index: 2, kind: input, shape index: {}]
  %s3 = inlined_call_operand.vmem [shape: f32[118,2], index: 3, kind: input, shape index: {}]
  %s4 = inlined_call_operand.hbm [shape: f32[1,1,2], index: 4, kind: output, shape index: {}]
  %s5 = sld [smem:[#allocation0]]
  $region26: #{tpu_custom_call.1} parent=0
    _
  %s7 = ssub.s32 1, %s5
  %s8 = scalar_select 0, %s7, %s5
  $region1: #{tpu_custom_call.1} parent=0
    #allocation2 [shape = 'u8[512]{0}', space=vmem, size = 0x400, scoped, tag = 'output window, operand 0, single buffered']
    #allocation3 [shape = 's32[1]{0}', space=sflag, size = 0x4, scoped, tag = 'scoped memory for tpu_custom_call.1']
    %9 = vsyncpa [#allocation3], 0
    // Predicated region
    $region2: #{tpu_custom_call.1} parent=1 // pred_check
      _
    $region3: #{tpu_custom_call.1} parent=1 // pred_check_branch
      %11 = sbr.rel (0) target = $region5
    $region4: #{tpu_custom_call.1} parent=1 // pred_region
      _
    $region5: #{tpu_custom_call.1} parent=1 // pred_fallthru
      _
    // Predicated region
    $region6: #{tpu_custom_call.1} parent=1 // pred_check
      _
    $region7: #{tpu_custom_call.1} parent=1 // pred_check_branch
      %13 = sbr.rel (0) target = $region9
    $region8: #{tpu_custom_call.1} parent=1 // pred_region
      _
    $region9: #{tpu_custom_call.1} parent=1 // pred_fallthru
      _
    // Predicated region
    $region10: #{tpu_custom_call.1} parent=1 // pred_check
      _
    $region11: #{tpu_custom_call.1} parent=1 // pred_check_branch
      %15 = sbr.rel (0) target = $region13
    $region12: #{tpu_custom_call.1} parent=1 // pred_region
      _
    $region13: #{tpu_custom_call.1} parent=1 // pred_fallthru
      _
    // Predicated region
    $region14: #{tpu_custom_call.1} parent=1 // pred_check
      _
    $region15: #{tpu_custom_call.1} parent=1 // pred_check_branch
      %17 = sbr.rel (0) target = $region17
    $region16: #{tpu_custom_call.1} parent=1 // pred_region
      _
    $region17: #{tpu_custom_call.1} parent=1 // pred_fallthru
      _
    %v18 = vld [vmem:[%s0] sm:$0xff]
    %v19 = vld [vmem:[%s0 + $0x8] sm:$0xff]
    %v20 = vmax.f32 %v18, 0.0
    %v21 = vmax.f32 %v19, 0.0
    %v22 = vmin.f32 %v20, 1.0
    %v23 = vmin.f32 %v21, 1.0
    %v24 = vld [vmem:[%s1] sm:$0xff]
    %v25 = vld [vmem:[%s1 + $0x8] sm:$0xff]
    %v26 = vmax.f32 %v24, 0.0
    %v27 = vmax.f32 %v25, 0.0
    %v28 = vmin.f32 %v26, 1.0
    %v29 = vmin.f32 %v27, 1.0
    %v30 = vmul.f32 %v22, %v22
    %v31 = vmul.f32 %v23, %v23
    %v32 = vmul.f32 %v28, %v28
    %v33 = vmul.f32 %v29, %v29
    %v34 = vmul.f32 %v22, %v28
    %v35 = vmul.f32 %v23, %v29
    %v36 = vld [vmem:[%s2] sm:$0x3f]
    %vm37 = vcmask 130048
    %v39 = vsel %vm37, %v36, 0
    %41 = vmatpush.msra.mxu0 0.0
    %42 = vmatpush.msra.mxu0 0.0
    %43 = vmatpush.msra.mxu0 0.0
    %44 = vmatpush.msra.mxu0 0.0
    %45 = vmatpush.msra.mxu0 0.0
    %46 = vmatpush.msra.mxu0 0.0
    %47 = vmatpush.msra.mxu0 0.0
    %48 = vmatpush.msra.mxu0 0.0
    %49 = vmatpush.msra.mxu0 0.0
    %50 = vmatpush.msra.mxu0 0.0
    %51 = vmatpush.msra.mxu0 0.0
    %52 = vmatpush.msra.mxu0 0.0
    %53 = vmatpush.msra.mxu0 0.0
    %54 = vmatpush.msra.mxu0 0.0
    %55 = vmatpush.msra.mxu0 %v23
    %56 = vmatpush.msra.mxu0 %v22
    %57 = vmatmul.f32.gmra.mxu0 %v39
    %v58 = vpop.f32.mrf.mxu0
    %v59 = vadd.f32 0.0, %v58
    %60 = vdwg.mxu0
    %61 = vmatpush.msra.mxu0 0.0
    %62 = vmatpush.msra.mxu0 0.0
    %63 = vmatpush.msra.mxu0 0.0
    %64 = vmatpush.msra.mxu0 0.0
    %65 = vmatpush.msra.mxu0 0.0
    %66 = vmatpush.msra.mxu0 0.0
    %67 = vmatpush.msra.mxu0 0.0
    %68 = vmatpush.msra.mxu0 0.0
    %69 = vmatpush.msra.mxu0 0.0
    %70 = vmatpush.msra.mxu0 0.0
    %71 = vmatpush.msra.mxu0 0.0
    %72 = vmatpush.msra.mxu0 0.0
    %73 = vmatpush.msra.mxu0 0.0
    %74 = vmatpush.msra.mxu0 0.0
    %75 = vmatpush.msra.mxu0 %v29
    %76 = vmatpush.msra.mxu0 %v28
    %77 = vmatmul.f32.gmra.mxu0 %v39
    %v78 = vpop.f32.mrf.mxu0
    %v79 = vadd.f32 0.0, %v78
    %80 = vdwg.mxu0
    %81 = vmatpush.msra.mxu0 0.0
    %82 = vmatpush.msra.mxu0 0.0
    %83 = vmatpush.msra.mxu0 0.0
    %84 = vmatpush.msra.mxu0 0.0
    %85 = vmatpush.msra.mxu0 0.0
    %86 = vmatpush.msra.mxu0 0.0
    %87 = vmatpush.msra.mxu0 0.0
    %88 = vmatpush.msra.mxu0 0.0
    %89 = vmatpush.msra.mxu0 0.0
    %90 = vmatpush.msra.mxu0 0.0
    %91 = vmatpush.msra.mxu0 0.0
    %92 = vmatpush.msra.mxu0 0.0
    %93 = vmatpush.msra.mxu0 0.0
    %94 = vmatpush.msra.mxu0 0.0
    %95 = vmatpush.msra.mxu0 %v31
    %96 = vmatpush.msra.mxu0 %v30
    %97 = vmatmul.f32.gmra.mxu0 %v39
    %v98 = vpop.f32.mrf.mxu0
    %v99 = vadd.f32 0.0, %v98
    %100 = vdwg.mxu0
    %101 = vmatpush.msra.mxu0 0.0
    %102 = vmatpush.msra.mxu0 0.0
    %103 = vmatpush.msra.mxu0 0.0
    %104 = vmatpush.msra.mxu0 0.0
    %105 = vmatpush.msra.mxu0 0.0
    %106 = vmatpush.msra.mxu0 0.0
    %107 = vmatpush.msra.mxu0 0.0
    %108 = vmatpush.msra.mxu0 0.0
    %109 = vmatpush.msra.mxu0 0.0
    %110 = vmatpush.msra.mxu0 0.0
    %111 = vmatpush.msra.mxu0 0.0
    %112 = vmatpush.msra.mxu0 0.0
    %113 = vmatpush.msra.mxu0 0.0
    %114 = vmatpush.msra.mxu0 0.0
    %115 = vmatpush.msra.mxu0 %v33
    %116 = vmatpush.msra.mxu0 %v32
    %117 = vmatmul.f32.gmra.mxu0 %v39
    %v118 = vpop.f32.mrf.mxu0
    %v119 = vadd.f32 0.0, %v118
    %120 = vdwg.mxu0
    %121 = vmatpush.msra.mxu0 0.0
    %122 = vmatpush.msra.mxu0 0.0
    %123 = vmatpush.msra.mxu0 0.0
    %124 = vmatpush.msra.mxu0 0.0
    %125 = vmatpush.msra.mxu0 0.0
    %126 = vmatpush.msra.mxu0 0.0
    %127 = vmatpush.msra.mxu0 0.0
    %128 = vmatpush.msra.mxu0 0.0
    %129 = vmatpush.msra.mxu0 0.0
    %130 = vmatpush.msra.mxu0 0.0
    %131 = vmatpush.msra.mxu0 0.0
    %132 = vmatpush.msra.mxu0 0.0
    %133 = vmatpush.msra.mxu0 0.0
    %134 = vmatpush.msra.mxu0 0.0
    %135 = vmatpush.msra.mxu0 %v35
    %136 = vmatpush.msra.mxu0 %v34
    %137 = vmatmul.f32.gmra.mxu0 %v39
    %v138 = vpop.f32.mrf.mxu0
    %v139 = vadd.f32 0.0, %v138
    %140 = vdwg.mxu0
    %v141 = vmul.f32 %v59, 0.0010283801
    %v142 = vmul.f32 %v79, 0.0010283801
    %v143 = vmul.f32 %v99, 0.0010283801
    %v144 = vmul.f32 %v119, 0.0010283801
    %v145 = vmul.f32 %v139, 0.0010283801
    %v146 = vmul.f32 %v59, 0.007598758
    %v147 = vmul.f32 %v79, 0.007598758
    %v148 = vmul.f32 %v99, 0.007598758
    %v149 = vmul.f32 %v119, 0.007598758
    %v150 = vmul.f32 %v139, 0.007598758
    %156 = vrot.lane.b32.xlu0 %v146, 127
    %v157 = vpop.permute.xlu0 %156
    %158 = vrot.lane.b32.xlu0 %v147, 127
    %v159 = vpop.permute.xlu0 %158
    %160 = vrot.lane.b32.xlu0 %v148, 127
    %v161 = vpop.permute.xlu0 %160
    %162 = vrot.lane.b32.xlu0 %v149, 127
    %v163 = vpop.permute.xlu0 %162
    %164 = vrot.lane.b32.xlu0 %v150, 127
    %v165 = vpop.permute.xlu0 %164
    %vm166 = vcmask 1039360
    %v167 = vsel %vm166, %v157, %v159
    %v168 = vsel %vm166, %v159, %v161
    %v169 = vsel %vm166, %v161, %v163
    %v170 = vsel %vm166, %v163, %v165
    %v176 = vadd.f32 %v141, %v167
    %v177 = vadd.f32 %v142, %v168
    %v178 = vadd.f32 %v143, %v169
    %v179 = vadd.f32 %v144, %v170
    %v180 = vadd.f32 %v145, %v165
    %v181 = vmul.f32 %v59, 0.036000773
    %v182 = vmul.f32 %v79, 0.036000773
    %v183 = vmul.f32 %v99, 0.036000773
    %v184 = vmul.f32 %v119, 0.036000773
    %v185 = vmul.f32 %v139, 0.036000773
    %191 = vrot.lane.b32.xlu0 %v181, 126
    %v192 = vpop.permute.xlu0 %191
    %193 = vrot.lane.b32.xlu0 %v182, 126
    %v194 = vpop.permute.xlu0 %193
    %195 = vrot.lane.b32.xlu0 %v183, 126
    %v196 = vpop.permute.xlu0 %195
    %197 = vrot.lane.b32.xlu0 %v184, 126
    %v198 = vpop.permute.xlu0 %197
    %199 = vrot.lane.b32.xlu0 %v185, 126
    %v200 = vpop.permute.xlu0 %199
    %vm201 = vcmask 1031168
    %v202 = vsel %vm201, %v192, %v194
    %v203 = vsel %vm201, %v194, %v196
    %v204 = vsel %vm201, %v196, %v198
    %v205 = vsel %vm201, %v198, %v200
    %v211 = vadd.f32 %v176, %v202
    %v212 = vadd.f32 %v177, %v203
    %v213 = vadd.f32 %v178, %v204
    %v214 = vadd.f32 %v179, %v205
    %v215 = vadd.f32 %v180, %v200
    %v216 = vmul.f32 %v59, 0.10936069
    %v217 = vmul.f32 %v79, 0.10936069
    %v218 = vmul.f32 %v99, 0.10936069
    %v219 = vmul.f32 %v119, 0.10936069
    %v220 = vmul.f32 %v139, 0.10936069
    %226 = vrot.lane.b32.xlu0 %v216, 125
    %v227 = vpop.permute.xlu0 %226
    %228 = vrot.lane.b32.xlu0 %v217, 125
    %v229 = vpop.permute.xlu0 %228
    %230 = vrot.lane.b32.xlu0 %v218, 125
    %v231 = vpop.permute.xlu0 %230
    %232 = vrot.lane.b32.xlu0 %v219, 125
    %v233 = vpop.permute.xlu0 %232
    %234 = vrot.lane.b32.xlu0 %v220, 125
    %v235 = vpop.permute.xlu0 %234
    %vm236 = vcmask 1022976
    %v237 = vsel %vm236, %v227, %v229
    %v238 = vsel %vm236, %v229, %v231
    %v239 = vsel %vm236, %v231, %v233
    %v240 = vsel %vm236, %v233, %v235
    %v246 = vadd.f32 %v211, %v237
    %v247 = vadd.f32 %v212, %v238
    %v248 = vadd.f32 %v213, %v239
    %v249 = vadd.f32 %v214, %v240
    %v250 = vadd.f32 %v215, %v235
    %v251 = vmul.f32 %v59, 0.21300554
    %v252 = vmul.f32 %v79, 0.21300554
    %v253 = vmul.f32 %v99, 0.21300554
    %v254 = vmul.f32 %v119, 0.21300554
    %v255 = vmul.f32 %v139, 0.21300554
    %261 = vrot.lane.b32.xlu0 %v251, 124
    %v262 = vpop.permute.xlu0 %261
    %263 = vrot.lane.b32.xlu0 %v252, 124
    %v264 = vpop.permute.xlu0 %263
    %265 = vrot.lane.b32.xlu0 %v253, 124
    %v266 = vpop.permute.xlu0 %265
    %267 = vrot.lane.b32.xlu0 %v254, 124
    %v268 = vpop.permute.xlu0 %267
    %269 = vrot.lane.b32.xlu0 %v255, 124
    %v270 = vpop.permute.xlu0 %269
    %vm271 = vcmask 1014784
    %v272 = vsel %vm271, %v262, %v264
    %v273 = vsel %vm271, %v264, %v266
    %v274 = vsel %vm271, %v266, %v268
    %v275 = vsel %vm271, %v268, %v270
    %v281 = vadd.f32 %v246, %v272
    %v282 = vadd.f32 %v247, %v273
    %v283 = vadd.f32 %v248, %v274
    %v284 = vadd.f32 %v249, %v275
    %v285 = vadd.f32 %v250, %v270
    %v286 = vmul.f32 %v59, 0.26601171
    %v287 = vmul.f32 %v79, 0.26601171
    %v288 = vmul.f32 %v99, 0.26601171
    %v289 = vmul.f32 %v119, 0.26601171
    %v290 = vmul.f32 %v139, 0.26601171
    %296 = vrot.lane.b32.xlu0 %v286, 123
    %v297 = vpop.permute.xlu0 %296
    %298 = vrot.lane.b32.xlu0 %v287, 123
    %v299 = vpop.permute.xlu0 %298
    %300 = vrot.lane.b32.xlu0 %v288, 123
    %v301 = vpop.permute.xlu0 %300
    %302 = vrot.lane.b32.xlu0 %v289, 123
    %v303 = vpop.permute.xlu0 %302
    %304 = vrot.lane.b32.xlu0 %v290, 123
    %v305 = vpop.permute.xlu0 %304
    %vm306 = vcmask 1006592
    %v307 = vsel %vm306, %v297, %v299
    %v308 = vsel %vm306, %v299, %v301
    %v309 = vsel %vm306, %v301, %v303
    %v310 = vsel %vm306, %v303, %v305
    %v316 = vadd.f32 %v281, %v307
    %v317 = vadd.f32 %v282, %v308
    %v318 = vadd.f32 %v283, %v309
    %v319 = vadd.f32 %v284, %v310
    %v320 = vadd.f32 %v285, %v305
    %321 = vrot.lane.b32.xlu0 %v251, 122
    %v322 = vpop.permute.xlu0 %321
    %323 = vrot.lane.b32.xlu0 %v252, 122
    %v324 = vpop.permute.xlu0 %323
    %325 = vrot.lane.b32.xlu0 %v253, 122
    %v326 = vpop.permute.xlu0 %325
    %327 = vrot.lane.b32.xlu0 %v254, 122
    %v328 = vpop.permute.xlu0 %327
    %329 = vrot.lane.b32.xlu0 %v255, 122
    %v330 = vpop.permute.xlu0 %329
    %vm331 = vcmask 998400
    %v332 = vsel %vm331, %v322, %v324
    %v333 = vsel %vm331, %v324, %v326
    %v334 = vsel %vm331, %v326, %v328
    %v335 = vsel %vm331, %v328, %v330
    %v341 = vadd.f32 %v316, %v332
    %v342 = vadd.f32 %v317, %v333
    %v343 = vadd.f32 %v318, %v334
    %v344 = vadd.f32 %v319, %v335
    %v345 = vadd.f32 %v320, %v330
    %346 = vrot.lane.b32.xlu0 %v216, 121
    %v347 = vpop.permute.xlu0 %346
    %348 = vrot.lane.b32.xlu0 %v217, 121
    %v349 = vpop.permute.xlu0 %348
    %350 = vrot.lane.b32.xlu0 %v218, 121
    %v351 = vpop.permute.xlu0 %350
    %352 = vrot.lane.b32.xlu0 %v219, 121
    %v353 = vpop.permute.xlu0 %352
    %354 = vrot.lane.b32.xlu0 %v220, 121
    %v355 = vpop.permute.xlu0 %354
    %vm356 = vcmask 990208
    %v357 = vsel %vm356, %v347, %v349
    %v358 = vsel %vm356, %v349, %v351
    %v359 = vsel %vm356, %v351, %v353
    %v360 = vsel %vm356, %v353, %v355
    %v366 = vadd.f32 %v341, %v357
    %v367 = vadd.f32 %v342, %v358
    %v368 = vadd.f32 %v343, %v359
    %v369 = vadd.f32 %v344, %v360
    %v370 = vadd.f32 %v345, %v355
    %371 = vrot.lane.b32.xlu0 %v181, 120
    %v372 = vpop.permute.xlu0 %371
    %373 = vrot.lane.b32.xlu0 %v182, 120
    %v374 = vpop.permute.xlu0 %373
    %375 = vrot.lane.b32.xlu0 %v183, 120
    %v376 = vpop.permute.xlu0 %375
    %377 = vrot.lane.b32.xlu0 %v184, 120
    %v378 = vpop.permute.xlu0 %377
    %379 = vrot.lane.b32.xlu0 %v185, 120
    %v380 = vpop.permute.xlu0 %379
    %vm381 = vcmask 982016
    %v382 = vsel %vm381, %v372, %v374
    %v383 = vsel %vm381, %v374, %v376
    %v384 = vsel %vm381, %v376, %v378
    %v385 = vsel %vm381, %v378, %v380
    %v391 = vadd.f32 %v366, %v382
    %v392 = vadd.f32 %v367, %v383
    %v393 = vadd.f32 %v368, %v384
    %v394 = vadd.f32 %v369, %v385
    %v395 = vadd.f32 %v370, %v380
    %396 = vrot.lane.b32.xlu0 %v146, 119
    %v397 = vpop.permute.xlu0 %396
    %398 = vrot.lane.b32.xlu0 %v147, 119
    %v399 = vpop.permute.xlu0 %398
    %400 = vrot.lane.b32.xlu0 %v148, 119
    %v401 = vpop.permute.xlu0 %400
    %402 = vrot.lane.b32.xlu0 %v149, 119
    %v403 = vpop.permute.xlu0 %402
    %404 = vrot.lane.b32.xlu0 %v150, 119
    %v405 = vpop.permute.xlu0 %404
    %vm406 = vcmask 973824
    %v407 = vsel %vm406, %v397, %v399
    %v408 = vsel %vm406, %v399, %v401
    %v409 = vsel %vm406, %v401, %v403
    %v410 = vsel %vm406, %v403, %v405
    %v416 = vadd.f32 %v391, %v407
    %v417 = vadd.f32 %v392, %v408
    %v418 = vadd.f32 %v393, %v409
    %v419 = vadd.f32 %v394, %v410
    %v420 = vadd.f32 %v395, %v405
    %426 = vrot.lane.b32.xlu0 %v141, 118
    %v427 = vpop.permute.xlu0 %426
    %428 = vrot.lane.b32.xlu0 %v142, 118
    %v429 = vpop.permute.xlu0 %428
    %430 = vrot.lane.b32.xlu0 %v143, 118
    %v431 = vpop.permute.xlu0 %430
    %432 = vrot.lane.b32.xlu0 %v144, 118
    %v433 = vpop.permute.xlu0 %432
    %434 = vrot.lane.b32.xlu0 %v145, 118
    %v435 = vpop.permute.xlu0 %434
    %vm436 = vcmask 965632
    %v437 = vsel %vm436, %v427, %v429
    %v438 = vsel %vm436, %v429, %v431
    %v439 = vsel %vm436, %v431, %v433
    %v440 = vsel %vm436, %v433, %v435
    %v446 = vadd.f32 %v416, %v437
    %v447 = vadd.f32 %v417, %v438
    %v448 = vadd.f32 %v418, %v439
    %v449 = vadd.f32 %v419, %v440
    %v450 = vadd.f32 %v420, %v435
    %v451 = vmul.f32 %v446, %v446
    %v452 = vsub.f32 %v448, %v451
    %v453 = vmul.f32 %v447, %v447
    %v454 = vsub.f32 %v449, %v453
    %v455 = vmul.f32 %v446, %v447
    %v456 = vsub.f32 %v450, %v455
    %v457 = vmul.f32 %v446, 2.0
    %v458 = vmul.f32 %v457, %v447
    %v459 = vadd.f32 %v458, 0.0001
    %v460 = vmul.f32 %v456, 2.0
    %v461 = vadd.f32 %v460, 0.0009
    %v462 = vmul.f32 %v459, %v461
    %v463 = vadd.f32 %v451, %v453
    %v464 = vadd.f32 %v463, 0.0001
    %v465 = vadd.f32 %v452, %v454
    %v466 = vadd.f32 %v465, 0.0009
    %v467 = vmul.f32 %v464, %v466
    %v468 = vrcp.pop %v467
    %v469 = vmul.f32 %v467, %v468
    %v470 = vsub.f32 1.0, %v469
    %v471 = vmul.f32 %v468, %v470
    %v472 = vadd.f32 %v468, %v471
    %vm473 = vweird.f32 %v467
    %vm474 = vweird.f32 %v468
    %vm475 = vmor %vm473, %vm474
    %v476 = vsel %vm475, %v468, %v472
    %v477 = vand.u32 2147483647, %v467
    %vm478 = vcmp.eq.f32.partialorder %v477, 8.507059e+37
    %v479 = vand.u32 %v467, 2147483648
    %v480 = vor.u32 1.1754944e-38, %v479
    %v481 = vsel %vm478, %v480, %v476
    %v482 = vmul.f32 %v462, %v481
    %vm483 = vcmask 963584
    %v484 = vsel %vm483, %v482, 0.0
    %v485 = vrot.slane %v484, 4
    %v486 = vadd.f32 %v484, %v485
    %v487 = vrot.slane %v486, 2
    %v488 = vadd.f32 %v486, %v487
    %v489 = vrot.slane %v488, 1
    %v490 = vadd.f32 %v488, %v489
    %v491 = vld [vmem:[%s3] sm:$0xff]
    %v492 = vld [vmem:[%s3 + $0x8] sm:$0xff]
    %v493 = vld [vmem:[%s3 + $0x10] sm:$0xff]
    %v494 = vld [vmem:[%s3 + $0x18] sm:$0xff]
    %v495 = vld [vmem:[%s3 + $0x20] sm:$0xff]
    %v496 = vld [vmem:[%s3 + $0x28] sm:$0xff]
    %v497 = vld [vmem:[%s3 + $0x30] sm:$0xff]
    %v498 = vld [vmem:[%s3 + $0x38] sm:$0xff]
    %v499 = vld [vmem:[%s3 + $0x40] sm:$0xff]
    %v500 = vld [vmem:[%s3 + $0x48] sm:$0xff]
    %v501 = vld [vmem:[%s3 + $0x50] sm:$0xff]
    %v502 = vld [vmem:[%s3 + $0x58] sm:$0xff]
    %v503 = vld [vmem:[%s3 + $0x60] sm:$0xff]
    %v504 = vld [vmem:[%s3 + $0x68] sm:$0xff]
    %v505 = vld [vmem:[%s3 + $0x70] sm:$0x3f]
    %v507 = vsel %vm436, %v490, 0
    %vm509 = vcmask 1045504
    %v511 = vsel %vm509, %v505, 0
    %513 = vmatpush.msra.mxu0 0.0
    %514 = vmatpush.msra.mxu0 %v511
    %515 = vmatpush.msra.mxu0 %v504
    %516 = vmatpush.msra.mxu0 %v503
    %517 = vmatpush.msra.mxu0 %v502
    %518 = vmatpush.msra.mxu0 %v501
    %519 = vmatpush.msra.mxu0 %v500
    %520 = vmatpush.msra.mxu0 %v499
    %521 = vmatpush.msra.mxu0 %v498
    %522 = vmatpush.msra.mxu0 %v497
    %523 = vmatpush.msra.mxu0 %v496
    %524 = vmatpush.msra.mxu0 %v495
    %525 = vmatpush.msra.mxu0 %v494
    %526 = vmatpush.msra.mxu0 %v493
    %527 = vmatpush.msra.mxu0 %v492
    %528 = vmatpush.msra.mxu0 %v491
    %529 = vmatmul.f32.gmra.mxu0 %v507
    %v530 = vpop.f32.mrf.mxu0
    %v531 = vadd.f32 0.0, %v530
    %532 = vdwg.mxu0
    %v533 = vsub.f32 1.0, %v531
    %vm534 = vcmask 8192
    %535 = vst.msk [vmem:[#allocation2] sm:$0x1] %vm534, %v533
    // Predicated region
    $region18: #{tpu_custom_call.1} parent=1 // pred_check
      _
    $region19: #{tpu_custom_call.1} parent=1 // pred_check_branch
      %537 = sbr.rel (0) target = $region21
    $region20: #{tpu_custom_call.1} parent=1 // pred_region
      %539 = vsyncadd [#allocation3], 0
      %s541 = sshll.u32 [#allocation2], 4
      %s542 = int_to_ptr.vmem [resolvable:$true] %s541
      %s543 = sshll.u32 %s4, 4
      %s544 = int_to_ptr.hbm [resolvable:$true] %s543
      %546 = dma.vmem_to_hbm [thread:$0]  %s542, 16, %s544, [#allocation3]
    $region21: #{tpu_custom_call.1} parent=1 // pred_fallthru
      _
    // Predicated region
    $region22: #{tpu_custom_call.1} parent=1 // pred_check
      _
    $region23: #{tpu_custom_call.1} parent=1 // pred_check_branch
      %548 = sbr.rel (0) target = $region25
    $region24: #{tpu_custom_call.1} parent=1 // pred_region
      %550 = dma.done [#allocation3], 16
    $region25: #{tpu_custom_call.1} parent=1 // pred_fallthru
      _
    %551 = vsyncpa [#allocation3], 1

</llo_original>
